<compile_context>
chip_gen: v7x
topology: tpu7x:2x2x1
jax: 0.10.0
libtpu: 0.0.40
codegen_flags: <defaults>
</compile_context>

<pallas_src>
import math
import functools

import jax
import jax.numpy as jnp
from jax.experimental import pallas as pl
from jax.experimental.pallas import tpu as pltpu


_DEFAULT_BLOCK_BYTES = 4 * 1024 * 1024    # target size of one x block per pipeline buffer
_SMALL_TOTAL_BYTES = 2 * 1024 * 1024      # below this, use a single-step kernel
_VMEM_RESIDENT_CAP = 44 * 1024 * 1024     # cap on double-buffered resident bytes
_VMEM_LIMIT_CAP = 48 * 1024 * 1024        # scoped-VMEM limit we request (< 64 MiB v7x physical)


def _sublane(dtype):
    """Sublane packing unit: 8 rows for 4-byte dtypes, 16 for bf16, 32 for int8."""
    return max(8, 32 // jnp.dtype(dtype).itemsize)


def _choose_row_tile(rows, cols, x_item, p_item, sub, block_bytes):
    """Row tile that (a) is a multiple of the sublane pack, (b) keeps the x block
    near `block_bytes` and (c) keeps the double-buffered resident footprint of
    all three refs (x + out + positions, each in its own dtype) under the VMEM
    cap. Tiles need not divide `rows` (the grid uses cdiv + masked edge)."""
    row_x = cols * x_item
    row_step = cols * (2 * x_item + p_item)            # x + out + positions per step
    max_rows = max(sub, block_bytes // max(1, row_x))
    hard_cap = max(sub, _VMEM_RESIDENT_CAP // max(1, 2 * row_step))
    max_rows = min(max_rows, hard_cap)
    if rows <= max_rows:
        return rows                                    # single s-step (full-dim exemption)
    return max(sub, (max_rows // sub) * sub)


def _add_pos_kernel(x_ref, pos_ref, o_ref):
    # x_ref/o_ref: (1, TS, C) block of one batch element (or (B, R, C) on the
    # single-step path). pos_ref: (1, TS, C) shared block, broadcast over batch.
    # The dtype alignment of the table is free VPU work hidden under DMA.
    o_ref[...] = x_ref[...] + pos_ref[...].astype(o_ref.dtype)


def _launch(x3, pos3, *, ts, grid_s, x_item, p_item, donate_x):
    """Tiled launch. x3: (B, R, C); pos3: (1, R_pos >= covered rows, C)."""
    B, R, C = x3.shape
    step_bytes = ts * C * (2 * x_item + p_item)
    vmem_limit = int(min(_VMEM_LIMIT_CAP,
                         max(32 * 1024 * 1024, 2 * step_bytes + (4 << 20))))
    extra = {}
    if donate_x:
        # Only applied on the non-reshaped path; only worthwhile if the caller
        # actually donates x at the jit boundary.
        extra["input_output_aliases"] = {0: 0}
    return pl.pallas_call(
        _add_pos_kernel,
        out_shape=jax.ShapeDtypeStruct((B, R, C), x3.dtype),
        # s outermost, b innermost: positions block index constant across b ->
        # Pallas skips the re-DMA; table streamed once total.
        grid=(grid_s, B),
        in_specs=[
            pl.BlockSpec((1, ts, C), lambda s, b: (b, s, 0)),   # x
            pl.BlockSpec((1, ts, C), lambda s, b: (0, s, 0)),   # positions (resident over b)
        ],
        out_specs=pl.BlockSpec((1, ts, C), lambda s, b: (b, s, 0)),
        compiler_params=pltpu.CompilerParams(
            # s parallel (megacore shards the many-tile axis on v7x even for
            # B=1/2); b arbitrary so per-core iteration keeps positions resident.
            dimension_semantics=("parallel", "arbitrary"),
            vmem_limit_bytes=vmem_limit,
        ),
        cost_estimate=pl.CostEstimate(
            flops=B * R * C,
            transcendentals=0,
            # x read + out write per element, positions read once total.
            bytes_accessed=2 * B * R * C * x_item + R * C * p_item,
        ),
        **extra,
    )(x3, pos3)


def _launch_single(x3, pos3, *, donate_x):
    """Single-step whole-array launch for tiny inputs (no per-tile overhead)."""
    B, R, C = x3.shape
    extra = {"input_output_aliases": {0: 0}} if donate_x else {}
    return pl.pallas_call(
        _add_pos_kernel,
        out_shape=jax.ShapeDtypeStruct((B, R, C), x3.dtype),
        grid=(1,),
        in_specs=[
            pl.BlockSpec((B, R, C), lambda i: (0, 0, 0)),
            pl.BlockSpec((1, R, C), lambda i: (0, 0, 0)),
        ],
        out_specs=pl.BlockSpec((B, R, C), lambda i: (0, 0, 0)),
        **extra,
    )(x3, pos3)


def temporal_position_embedding(x, positions, *, max_seq_len,
                                block_bytes=_DEFAULT_BLOCK_BYTES,
                                donate_x=False):
    """Apply temporal position embeddings: out = x + positions[:, :S, :].

    Args:
      x:           (B, S, D) input.
      positions:   (1, max_seq_len, D) learnable (or sinusoidal) table.
      max_seq_len: maximum allowed sequence length (static).
      block_bytes: static target size of one x VMEM block (per pipeline buffer).
      donate_x:    alias x to the output buffer (only if caller donates x; only
                   applied when x is not internally reshaped).

    Returns:
      (B, S, D) tensor with x's dtype.
    """
    B, S, D = x.shape
    if S > max_seq_len:
        raise ValueError(
            f"[MP-SEQ-ERROR] Input sequence length {S} exceeds maximum "
            f"allowed {max_seq_len}"
        )
    if (positions.ndim != 3 or positions.shape[0] != 1
            or positions.shape[2] != D or positions.shape[1] < S):
        raise ValueError("positions must have shape (1, max_seq_len >= S, d_model)")

    x_item = jnp.dtype(x.dtype).itemsize
    p_item = jnp.dtype(positions.dtype).itemsize
    sub = max(_sublane(x.dtype), _sublane(positions.dtype))

    if D % 128 == 0:
        # Lane-dense already: tile the sequence dim; the BlockSpec index_map
        # slices the table directly (no separate slice pass over HBM).
        x3, R, C = x, S, D
        pos_tiled = positions
        pos_small = None        # built lazily (needs the explicit :S slice)
        reshaped = False
    elif (S * D) % 128 == 0:
        # Small / ragged d_model: flatten (S, D) so the output last dim is a
        # multiple of 128 -> unmasked stores.
        R, C = (S * D) // 128, 128
        x3 = x.reshape(B, R, C)                       # free row-major reshape
        pos_tiled = positions[:, :S, :].reshape(1, R, C)
        pos_small = pos_tiled
        reshaped = True
    else:
        # Degenerate shapes: one full (S, D) slab per batch element
        # (full-array-dim exemption from the (8,128) constraint).
        return _launch(x, positions[:, :S, :], ts=S, grid_s=1,
                       x_item=x_item, p_item=p_item, donate_x=donate_x)

    total_bytes = R * C * (2 * B * x_item + p_item)
    if total_bytes <= min(_SMALL_TOTAL_BYTES, 3 * block_bytes):
        # Tiny input: a single whole-array step fits the block budget; skip the
        # pipeline and its ~0.35 us/step overhead.
        if pos_small is None:
            pos_small = positions[:, :S, :]
        out = _launch_single(x3, pos_small, donate_x=donate_x and not reshaped)
        return out.reshape(B, S, D) if reshaped else out

    ts = _choose_row_tile(R, C, x_item, p_item, sub, block_bytes)
    grid_s = pl.cdiv(R, ts)     # partial edge block is masked by Pallas
    out = _launch(x3, pos_tiled, ts=ts, grid_s=grid_s,
                  x_item=x_item, p_item=p_item,
                  donate_x=donate_x and not reshaped)
    return out.reshape(B, S, D) if reshaped else out


def init_params(key, d_model, max_seq_len, learnable=True, dtype=jnp.float32):
    """Deterministic parameter init matching the PyTorch module's __init__.
    Pass dtype = activation dtype (e.g. bf16) to pre-cast the table and halve
    its DMA width in the kernel."""
    if learnable:
        # nn.init.normal_(positions, mean=0.0, std=0.02)
        return 0.02 * jax.random.normal(key, (1, max_seq_len, d_model), dtype)
    # Sinusoidal (non-learnable) variant.
    position = jnp.arange(max_seq_len, dtype=jnp.float32)[:, None]
    div_term = jnp.exp(
        jnp.arange(0, d_model, 2, dtype=jnp.float32)
        * (-math.log(10000.0) / d_model)
    )
    pe = jnp.zeros((max_seq_len, d_model), dtype=jnp.float32)
    pe = pe.at[:, 0::2].set(jnp.sin(position * div_term))
    pe = pe.at[:, 1::2].set(jnp.cos(position * div_term))
    return pe[None].astype(dtype)


if __name__ == "__main__":
    key = jax.random.PRNGKey(0)
    k1, k2, k3, k4, k5, k6 = jax.random.split(key, 6)

    # Case 1: small module-consistent shape (B, S, D) = (2, 8, 32);
    # D < 128 exercises the lane-dense flatten + single-step fast path.
    B, S, D, MAX_LEN = 2, 8, 32, 16
    x = jax.random.normal(k1, (B, S, D), dtype=jnp.float32)
    positions = init_params(k2, d_model=D, max_seq_len=MAX_LEN, learnable=True)
    fn = jax.jit(functools.partial(temporal_position_embedding,
                                   max_seq_len=MAX_LEN))
    out = fn(x, positions)
    jax.block_until_ready(out)
    ref = x + positions[:, :S, :]
    assert out.shape == (B, S, D)
    assert jnp.allclose(out, ref, atol=1e-6), "case 1 mismatch vs reference"

    # Case 2: lane-aligned D = 128 with a small forced block size so the
    # reordered (S_tiles, B) grid path actually has multiple tiles and the
    # positions block stays resident across the inner batch loop.
    B2, S2, D2, MAX_LEN2 = 2, 64, 128, 128
    x2 = jax.random.normal(k3, (B2, S2, D2), dtype=jnp.float32)
    pos2 = init_params(k4, d_model=D2, max_seq_len=MAX_LEN2, learnable=True)
    fn2 = jax.jit(functools.partial(temporal_position_embedding,
                                    max_seq_len=MAX_LEN2,
                                    block_bytes=16 * 1024))
    out2 = fn2(x2, pos2)
    jax.block_until_ready(out2)
    ref2 = x2 + pos2[:, :S2, :]
    assert out2.shape == (B2, S2, D2)
    assert jnp.allclose(out2, ref2, atol=1e-6), "case 2 mismatch vs reference"

    # Case 3: S not divisible by the tile (S=40, tile=32) exercises the
    # cdiv grid + masked edge block.
    B3, S3, D3, MAX_LEN3 = 1, 40, 128, 64
    x3 = jax.random.normal(k5, (B3, S3, D3), dtype=jnp.float32)
    pos3 = init_params(k6, d_model=D3, max_seq_len=MAX_LEN3, learnable=True)
    fn3 = jax.jit(functools.partial(temporal_position_embedding,
                                    max_seq_len=MAX_LEN3,
                                    block_bytes=16 * 1024))
    out3 = fn3(x3, pos3)
    jax.block_until_ready(out3)
    ref3 = x3 + pos3[:, :S3, :]
    assert out3.shape == (B3, S3, D3)
    assert jnp.allclose(out3, ref3, atol=1e-6), "case 3 mismatch vs reference"

    print("KERNEL_OK")
</pallas_src>

<mosaic_0001>
module attributes {stable_mosaic.version = 11 : i64} {
  func.func @_add_pos_kernel(%arg0: i32, %arg1: memref<2x2x128xf32, #tpu.memory_space<vmem>>, %arg2: memref<1x2x128xf32, #tpu.memory_space<vmem>>, %arg3: memref<2x2x128xf32, #tpu.memory_space<vmem>>) attributes {dimension_semantics = [#tpu.dimension_semantics<arbitrary>], iteration_bounds = array<i64: 1>, scalar_prefetch = 0 : i64, scratch_operands = 0 : i64, tpu.core_type = #tpu.core_type<tc>, window_params = [{pipeline_mode = #tpu.pipeline_mode<synchronous>, transform_indices = @transform_0, window_bounds = array<i64: 2, 2, 128>}, {pipeline_mode = #tpu.pipeline_mode<synchronous>, transform_indices = @transform_1, window_bounds = array<i64: 1, 2, 128>}, {pipeline_mode = #tpu.pipeline_mode<synchronous>, transform_indices = @transform_2, window_bounds = array<i64: 2, 2, 128>}]} {
    %c0 = arith.constant 0 : index
    %c0_0 = arith.constant 0 : index
    %c0_1 = arith.constant 0 : index
    %0 = vector.load %arg1[%c0, %c0_0, %c0_1] : memref<2x2x128xf32, #tpu.memory_space<vmem>>, vector<2x2x128xf32>
    %c0_2 = arith.constant 0 : index
    %c0_3 = arith.constant 0 : index
    %c0_4 = arith.constant 0 : index
    %1 = vector.load %arg2[%c0_2, %c0_3, %c0_4] : memref<1x2x128xf32, #tpu.memory_space<vmem>>, vector<1x2x128xf32>
    %2 = vector.broadcast %1 : vector<1x2x128xf32> to vector<2x2x128xf32>
    %3 = arith.addf %0, %2 : vector<2x2x128xf32>
    %c0_5 = arith.constant 0 : index
    %c0_6 = arith.constant 0 : index
    %c0_7 = arith.constant 0 : index
    %4 = vector.load %arg3[%c0_5, %c0_6, %c0_7] : memref<2x2x128xf32, #tpu.memory_space<vmem>>, vector<2x2x128xf32>
    tpu.vector_store %arg3[%c0_5, %c0_6, %c0_7], %3 {strides = array<i32>} : memref<2x2x128xf32, #tpu.memory_space<vmem>>, vector<2x2x128xf32>,
    return
  }
  func.func @transform_0(%arg0: i32) -> (i32, i32, i32) {
    %c0_i32 = arith.constant 0 : i32
    %c0_i32_0 = arith.constant 0 : i32
    %c0_i32_1 = arith.constant 0 : i32
    %c0_i32_2 = arith.constant 0 : i32
    return %c0_i32, %c0_i32_0, %c0_i32_1 : i32, i32, i32
  }
  func.func @transform_1(%arg0: i32) -> (i32, i32, i32) {
    %c0_i32 = arith.constant 0 : i32
    %c0_i32_0 = arith.constant 0 : i32
    %c0_i32_1 = arith.constant 0 : i32
    %c0_i32_2 = arith.constant 0 : i32
    return %c0_i32, %c0_i32_0, %c0_i32_1 : i32, i32, i32
  }
  func.func @transform_2(%arg0: i32) -> (i32, i32, i32) {
    %c0_i32 = arith.constant 0 : i32
    %c0_i32_0 = arith.constant 0 : i32
    %c0_i32_1 = arith.constant 0 : i32
    %c0_i32_2 = arith.constant 0 : i32
    return %c0_i32, %c0_i32_0, %c0_i32_1 : i32, i32, i32
  }
}

</mosaic_0001>

<llo_original>
// kernel: temporal_position_embedding.1
$region0: #{temporal_position_embedding.1}
  #allocation0 [shape = 'u32[]', space=smem, size = 0x4, offset = 0x4, fixed_abs, tag = 'smem constant byte address 0x4 - core index']
  #allocation1 [shape = 'u32[144,128]{1,0:T(1,128)}', space=vmem, size = 0x12000, scoped, tag = 'internal scratch']
  %s0 = inlined_call_operand.vmem [shape: f32[2,2,128], index: 0, kind: input, shape index: {}]
  %s1 = inlined_call_operand.vmem [shape: f32[1,2,128], index: 1, kind: input, shape index: {}]
  %s2 = inlined_call_operand.vmem [shape: f32[2,2,128], index: 2, kind: output, shape index: {}]
  %s3 = sld [smem:[#allocation0]]
  $region18: #{temporal_position_embedding.1} parent=0
    _
  %s5 = ssub.s32 1, %s3
  %s6 = scalar_select 0, %s5, %s3
  // Predicated region
  $region2: #{temporal_position_embedding.1} parent=0 // pred_check
    _
  $region3: #{temporal_position_embedding.1} parent=0 // pred_check_branch
    %8 = sbr.rel (0) target = $region5
  $region4: #{temporal_position_embedding.1} parent=0 // pred_region
    _
  $region5: #{temporal_position_embedding.1} parent=0 // pred_fallthru
    _
  // Predicated region
  $region6: #{temporal_position_embedding.1} parent=0 // pred_check
    _
  $region7: #{temporal_position_embedding.1} parent=0 // pred_check_branch
    %10 = sbr.rel (0) target = $region9
  $region8: #{temporal_position_embedding.1} parent=0 // pred_region
    _
  $region9: #{temporal_position_embedding.1} parent=0 // pred_fallthru
    _
  %v11 = vld [vmem:[%s0] sm:$0x3]
  %v12 = vld [vmem:[%s0 + $0x2] sm:$0x3]
  %v13 = vld [vmem:[%s1] sm:$0x3]
  %v14 = vadd.f32 %v11, %v13
  %v15 = vadd.f32 %v12, %v13
  %16 = vst [vmem:[%s2] sm:$0x3] %v14
  %17 = vst [vmem:[%s2 + $0x2] sm:$0x3] %v15
  // Predicated region
  $region10: #{temporal_position_embedding.1} parent=0 // pred_check
    _
  $region11: #{temporal_position_embedding.1} parent=0 // pred_check_branch
    %19 = sbr.rel (0) target = $region13
  $region12: #{temporal_position_embedding.1} parent=0 // pred_region
    _
  $region13: #{temporal_position_embedding.1} parent=0 // pred_fallthru
    _
  // Predicated region
  $region14: #{temporal_position_embedding.1} parent=0 // pred_check
    _
  $region15: #{temporal_position_embedding.1} parent=0 // pred_check_branch
    %21 = sbr.rel (0) target = $region17
  $region16: #{temporal_position_embedding.1} parent=0 // pred_region
    _
  $region17: #{temporal_position_embedding.1} parent=0 // pred_fallthru
    _

</llo_original>
